<compile_context>
chip_gen: v5e
topology: v5e:2x2
jax: 0.10.0
libtpu: 0.0.40
codegen_flags: <defaults>
</compile_context>

<pallas_src>
import jax
import jax.numpy as jnp
from jax.experimental import pallas as pl
from jax.experimental.pallas import tpu as pltpu


# ----------------------------------------------------------------------------
# Fused kernel: dense -> gelu -> LayerNorm -> decoder, all in VMEM.
# ----------------------------------------------------------------------------
def _head_kernel(x_ref, w1_ref, b1_ref, g_ref, beta_ref, w2_ref, b2_ref,
                 out_ref):
    x = x_ref[...].astype(jnp.float32)                          # [tm, Dv]

    # transform.dense
    h = jnp.dot(x, w1_ref[...], preferred_element_type=jnp.float32) + b1_ref[...]

    # transform_act_fn (gelu)
    # TODO(synk): exact (erf) GELU approximated with the tanh form; erf is not
    # reliably lowered by Mosaic.  Reference below uses the same form.
    h = jax.nn.gelu(h, approximate=True)

    # transform.LayerNorm (eps = 1e-12), mean/var via sum * (1/Dv), rsqrt on EUP
    inv_d = 1.0 / h.shape[-1]
    mu = h.sum(axis=-1, keepdims=True) * inv_d
    d = h - mu
    var = (d * d).sum(axis=-1, keepdims=True) * inv_d
    hn = d * jax.lax.rsqrt(var + 1e-12)
    hn = hn * g_ref[...] + beta_ref[...]

    # decoder — lane-dense [tm, Dt] result, single unmasked store
    y = jnp.dot(hn, w2_ref[...], preferred_element_type=jnp.float32) + b2_ref[...]
    out_ref[...] = y.astype(out_ref.dtype)


# ----------------------------------------------------------------------------
# Python wrapper
# ----------------------------------------------------------------------------
def bert_image_prediction_head(hidden_states, params, *, block_rows=512):
    B, S, Dv = hidden_states.shape
    Dt = params["w_dec"].shape[1]
    M = B * S
    x2d = hidden_states.reshape(M, Dv)

    # Row tile: one step for small inputs; only tile (multiple-of-8 rows) when
    # the flattened row count is large and cleanly divisible.
    tm = M
    if M > block_rows and M % block_rows == 0:
        tm = block_rows

    out2d = pl.pallas_call(
        _head_kernel,
        out_shape=jax.ShapeDtypeStruct((M, Dt), jnp.float32),
        grid=(M // tm,),
        in_specs=[
            pl.BlockSpec((tm, Dv), lambda i: (i, 0)),   # x rows
            pl.BlockSpec((Dv, Dv), lambda i: (0, 0)),   # w_dense
            pl.BlockSpec((1, Dv), lambda i: (0, 0)),    # b_dense
            pl.BlockSpec((1, Dv), lambda i: (0, 0)),    # ln_gamma
            pl.BlockSpec((1, Dv), lambda i: (0, 0)),    # ln_beta
            pl.BlockSpec((Dv, Dt), lambda i: (0, 0)),   # w_dec
            pl.BlockSpec((1, Dt), lambda i: (0, 0)),    # b_dec
        ],
        out_specs=pl.BlockSpec((tm, Dt), lambda i: (i, 0)),
        compiler_params=pltpu.CompilerParams(
            dimension_semantics=("parallel",)),
    )(x2d, params["w_dense"], params["b_dense"],
      params["ln_gamma"], params["ln_beta"],
      params["w_dec"], params["b_dec"])

    return out2d.reshape(B, S, Dt)


# ----------------------------------------------------------------------------
# Pure-JAX reference (mirrors the PyTorch forward) for a sanity check.
# ----------------------------------------------------------------------------
def _reference(hidden_states, params):
    h = hidden_states @ params["w_dense"] + params["b_dense"][0]
    h = jax.nn.gelu(h, approximate=True)
    mu = h.mean(axis=-1, keepdims=True)
    var = ((h - mu) ** 2).mean(axis=-1, keepdims=True)
    h = (h - mu) / jnp.sqrt(var + 1e-12)
    h = h * params["ln_gamma"][0] + params["ln_beta"][0]
    return h @ params["w_dec"] + params["b_dec"][0]


if __name__ == "__main__":
    # config: v_hidden_size=32, v_target_size=128, hidden_act="gelu"
    B, S, Dv, Dt = 2, 8, 32, 128

    key = jax.random.PRNGKey(0)
    ks = jax.random.split(key, 7)
    init = lambda k, shape: (0.02 * jax.random.normal(k, shape)).astype(jnp.float32)

    params = {
        "w_dense": init(ks[0], (Dv, Dv)), "b_dense": init(ks[1], (1, Dv)),
        "ln_gamma": 1.0 + init(ks[2], (1, Dv)), "ln_beta": init(ks[3], (1, Dv)),
        "w_dec": init(ks[4], (Dv, Dt)), "b_dec": init(ks[5], (1, Dt)),
    }
    hidden_states = jax.random.normal(ks[6], (B, S, Dv), dtype=jnp.float32)

    out = bert_image_prediction_head(hidden_states, params)
    out = jax.block_until_ready(out)

    ref = _reference(hidden_states, params)
    assert out.shape == (B, S, Dt)
    assert jnp.allclose(out, ref, atol=1e-5, rtol=1e-5), "mismatch vs reference"

    print("KERNEL_OK")
</pallas_src>

<mosaic_0001>
module attributes {stable_mosaic.version = 11 : i64} {
  func.func @_head_kernel(%arg0: i32, %arg1: memref<16x32xf32, #tpu.memory_space<vmem>>, %arg2: memref<32x32xf32, #tpu.memory_space<vmem>>, %arg3: memref<1x32xf32, #tpu.memory_space<vmem>>, %arg4: memref<1x32xf32, #tpu.memory_space<vmem>>, %arg5: memref<1x32xf32, #tpu.memory_space<vmem>>, %arg6: memref<32x128xf32, #tpu.memory_space<vmem>>, %arg7: memref<1x128xf32, #tpu.memory_space<vmem>>, %arg8: memref<16x128xf32, #tpu.memory_space<vmem>>) attributes {dimension_semantics = [#tpu.dimension_semantics<parallel>], iteration_bounds = array<i64: 1>, scalar_prefetch = 0 : i64, scratch_operands = 0 : i64, tpu.core_type = #tpu.core_type<tc>, window_params = [{transform_indices = @transform_0, window_bounds = array<i64: 16, 32>}, {pipeline_mode = #tpu.pipeline_mode<synchronous>, transform_indices = @transform_1, window_bounds = array<i64: 32, 32>}, {pipeline_mode = #tpu.pipeline_mode<synchronous>, transform_indices = @transform_2, window_bounds = array<i64: 1, 32>}, {pipeline_mode = #tpu.pipeline_mode<synchronous>, transform_indices = @transform_3, window_bounds = array<i64: 1, 32>}, {pipeline_mode = #tpu.pipeline_mode<synchronous>, transform_indices = @transform_4, window_bounds = array<i64: 1, 32>}, {pipeline_mode = #tpu.pipeline_mode<synchronous>, transform_indices = @transform_5, window_bounds = array<i64: 32, 128>}, {pipeline_mode = #tpu.pipeline_mode<synchronous>, transform_indices = @transform_6, window_bounds = array<i64: 1, 128>}, {transform_indices = @transform_7, window_bounds = array<i64: 16, 128>}]} {
    %c0 = arith.constant 0 : index
    %c0_0 = arith.constant 0 : index
    %0 = vector.load %arg1[%c0, %c0_0] : memref<16x32xf32, #tpu.memory_space<vmem>>, vector<16x32xf32>
    %c0_1 = arith.constant 0 : index
    %c0_2 = arith.constant 0 : index
    %1 = vector.load %arg2[%c0_1, %c0_2] : memref<32x32xf32, #tpu.memory_space<vmem>>, vector<32x32xf32>
    %cst = arith.constant dense<0.000000e+00> : vector<16x32xf32>
    %2 = tpu.matmul %0, %1, %cst {dimension_numbers = #tpu.dot_dimension_numbers<[1], [0], [0], [1], [0, 0, 1, 1], [], []>} : vector<16x32xf32>, vector<32x32xf32>, vector<16x32xf32> -> vector<16x32xf32>
    %c0_3 = arith.constant 0 : index
    %c0_4 = arith.constant 0 : index
    %3 = vector.load %arg3[%c0_3, %c0_4] : memref<1x32xf32, #tpu.memory_space<vmem>>, vector<1x32xf32>
    %4 = vector.broadcast %3 : vector<1x32xf32> to vector<16x32xf32>
    %5 = arith.addf %2, %4 : vector<16x32xf32>
    %6 = arith.mulf %5, %5 : vector<16x32xf32>
    %7 = arith.mulf %5, %6 : vector<16x32xf32>
    %cst_5 = arith.constant 4.471500e-02 : f32
    %8 = vector.broadcast %cst_5 : f32 to vector<16x32xf32>
    %9 = arith.mulf %8, %7 : vector<16x32xf32>
    %10 = arith.addf %5, %9 : vector<16x32xf32>
    %cst_6 = arith.constant 0.797884583 : f32
    %11 = vector.broadcast %cst_6 : f32 to vector<16x32xf32>
    %12 = arith.mulf %11, %10 : vector<16x32xf32>
    %13 = math.tanh %12 : vector<16x32xf32>
    %cst_7 = arith.constant 1.000000e+00 : f32
    %14 = vector.broadcast %cst_7 : f32 to vector<16x32xf32>
    %15 = arith.addf %14, %13 : vector<16x32xf32>
    %cst_8 = arith.constant 5.000000e-01 : f32
    %16 = vector.broadcast %cst_8 : f32 to vector<16x32xf32>
    %17 = arith.mulf %16, %15 : vector<16x32xf32>
    %18 = arith.mulf %5, %17 : vector<16x32xf32>
    %cst_9 = arith.constant dense<0.000000e+00> : vector<16xf32>
    %19 = vector.multi_reduction <add>, %18, %cst_9 [1] : vector<16x32xf32> to vector<16xf32>
    %20 = vector.shape_cast %19 : vector<16xf32> to vector<16x1xf32>
    %cst_10 = arith.constant 3.125000e-02 : f32
    %21 = vector.broadcast %cst_10 : f32 to vector<16x1xf32>
    %22 = arith.mulf %20, %21 : vector<16x1xf32>
    %23 = vector.broadcast %22 : vector<16x1xf32> to vector<16x32xf32>
    %24 = arith.subf %18, %23 : vector<16x32xf32>
    %25 = arith.mulf %24, %24 : vector<16x32xf32>
    %cst_11 = arith.constant dense<0.000000e+00> : vector<16xf32>
    %26 = vector.multi_reduction <add>, %25, %cst_11 [1] : vector<16x32xf32> to vector<16xf32>
    %27 = vector.shape_cast %26 : vector<16xf32> to vector<16x1xf32>
    %cst_12 = arith.constant 3.125000e-02 : f32
    %28 = vector.broadcast %cst_12 : f32 to vector<16x1xf32>
    %29 = arith.mulf %27, %28 : vector<16x1xf32>
    %cst_13 = arith.constant 9.99999996E-13 : f32
    %30 = vector.broadcast %cst_13 : f32 to vector<16x1xf32>
    %31 = arith.addf %29, %30 : vector<16x1xf32>
    %32 = math.rsqrt %31 : vector<16x1xf32>
    %33 = vector.broadcast %32 : vector<16x1xf32> to vector<16x32xf32>
    %34 = arith.mulf %24, %33 : vector<16x32xf32>
    %c0_14 = arith.constant 0 : index
    %c0_15 = arith.constant 0 : index
    %35 = vector.load %arg4[%c0_14, %c0_15] : memref<1x32xf32, #tpu.memory_space<vmem>>, vector<1x32xf32>
    %36 = vector.broadcast %35 : vector<1x32xf32> to vector<16x32xf32>
    %37 = arith.mulf %34, %36 : vector<16x32xf32>
    %c0_16 = arith.constant 0 : index
    %c0_17 = arith.constant 0 : index
    %38 = vector.load %arg5[%c0_16, %c0_17] : memref<1x32xf32, #tpu.memory_space<vmem>>, vector<1x32xf32>
    %39 = vector.broadcast %38 : vector<1x32xf32> to vector<16x32xf32>
    %40 = arith.addf %37, %39 : vector<16x32xf32>
    %c0_18 = arith.constant 0 : index
    %c0_19 = arith.constant 0 : index
    %41 = vector.load %arg6[%c0_18, %c0_19] : memref<32x128xf32, #tpu.memory_space<vmem>>, vector<32x128xf32>
    %cst_20 = arith.constant dense<0.000000e+00> : vector<16x128xf32>
    %42 = tpu.matmul %40, %41, %cst_20 {dimension_numbers = #tpu.dot_dimension_numbers<[1], [0], [0], [1], [0, 0, 1, 1], [], []>} : vector<16x32xf32>, vector<32x128xf32>, vector<16x128xf32> -> vector<16x128xf32>
    %c0_21 = arith.constant 0 : index
    %c0_22 = arith.constant 0 : index
    %43 = vector.load %arg7[%c0_21, %c0_22] : memref<1x128xf32, #tpu.memory_space<vmem>>, vector<1x128xf32>
    %44 = vector.broadcast %43 : vector<1x128xf32> to vector<16x128xf32>
    %45 = arith.addf %42, %44 : vector<16x128xf32>
    %c0_23 = arith.constant 0 : index
    %c0_24 = arith.constant 0 : index
    %46 = vector.load %arg8[%c0_23, %c0_24] : memref<16x128xf32, #tpu.memory_space<vmem>>, vector<16x128xf32>
    tpu.vector_store %arg8[%c0_23, %c0_24], %45 {strides = array<i32>} : memref<16x128xf32, #tpu.memory_space<vmem>>, vector<16x128xf32>,
    return
  }
  func.func @transform_0(%arg0: i32) -> (i32, i32) {
    %c0_i32 = arith.constant 0 : i32
    %c0_i32_0 = arith.constant 0 : i32
    return %arg0, %c0_i32 : i32, i32
  }
  func.func @transform_1(%arg0: i32) -> (i32, i32) {
    %c0_i32 = arith.constant 0 : i32
    %c0_i32_0 = arith.constant 0 : i32
    %c0_i32_1 = arith.constant 0 : i32
    return %c0_i32, %c0_i32_0 : i32, i32
  }
  func.func @transform_2(%arg0: i32) -> (i32, i32) {
    %c0_i32 = arith.constant 0 : i32
    %c0_i32_0 = arith.constant 0 : i32
    %c0_i32_1 = arith.constant 0 : i32
    return %c0_i32, %c0_i32_0 : i32, i32
  }
  func.func @transform_3(%arg0: i32) -> (i32, i32) {
    %c0_i32 = arith.constant 0 : i32
    %c0_i32_0 = arith.constant 0 : i32
    %c0_i32_1 = arith.constant 0 : i32
    return %c0_i32, %c0_i32_0 : i32, i32
  }
  func.func @transform_4(%arg0: i32) -> (i32, i32) {
    %c0_i32 = arith.constant 0 : i32
    %c0_i32_0 = arith.constant 0 : i32
    %c0_i32_1 = arith.constant 0 : i32
    return %c0_i32, %c0_i32_0 : i32, i32
  }
  func.func @transform_5(%arg0: i32) -> (i32, i32) {
    %c0_i32 = arith.constant 0 : i32
    %c0_i32_0 = arith.constant 0 : i32
    %c0_i32_1 = arith.constant 0 : i32
    return %c0_i32, %c0_i32_0 : i32, i32
  }
  func.func @transform_6(%arg0: i32) -> (i32, i32) {
    %c0_i32 = arith.constant 0 : i32
    %c0_i32_0 = arith.constant 0 : i32
    %c0_i32_1 = arith.constant 0 : i32
    return %c0_i32, %c0_i32_0 : i32, i32
  }
  func.func @transform_7(%arg0: i32) -> (i32, i32) {
    %c0_i32 = arith.constant 0 : i32
    %c0_i32_0 = arith.constant 0 : i32
    return %arg0, %c0_i32 : i32, i32
  }
}

</mosaic_0001>

<llo_original>
// kernel: tpu_custom_call.1
$region0: #{tpu_custom_call.1}
  #allocation0 [shape = 'u32[]', space=smem, size = 0x4, offset = 0x4, fixed_abs, tag = 'smem constant byte address 0x4 - core index']
  #allocation1 [shape = 'u32[72,128]{1,0:T(1,128)}', space=vmem, size = 0x9000, scoped, tag = 'internal scratch']
  %s0 = inlined_call_operand.hbm [shape: f32[16,32], index: 0, kind: input, shape index: {}]
  %s1 = inlined_call_operand.hbm [shape: f32[32,32], index: 1, kind: input, shape index: {}]
  %s2 = inlined_call_operand.vmem [shape: f32[1,32], index: 2, kind: input, shape index: {}]
  %s3 = inlined_call_operand.vmem [shape: f32[1,32], index: 3, kind: input, shape index: {}]
  %s4 = inlined_call_operand.vmem [shape: f32[1,32], index: 4, kind: input, shape index: {}]
  %s5 = inlined_call_operand.hbm [shape: f32[32,128], index: 5, kind: input, shape index: {}]
  %s6 = inlined_call_operand.vmem [shape: f32[1,128], index: 6, kind: input, shape index: {}]
  %s7 = inlined_call_operand.hbm [shape: f32[16,128], index: 7, kind: output, shape index: {}]
  %s8 = sld [smem:[#allocation0]]
  $region50: #{tpu_custom_call.1} parent=0
    _
  %s10 = ssub.s32 1, %s8
  %s11 = scalar_select 0, %s10, %s8
  $region1: #{tpu_custom_call.1} parent=0
    #allocation2 [shape = 'u8[8192]{0}', space=vmem, size = 0x2000, scoped, tag = 'input window, operand 0, single buffered']
    #allocation3 [shape = 's32[1]{0}', space=sflag, size = 0x4, scoped, tag = 'scoped memory for tpu_custom_call.1']
    #allocation4 [shape = 's32[1]{0}', space=sflag, size = 0x4, scoped, tag = 'scoped memory for tpu_custom_call.1']
    #allocation5 [shape = 'u8[16384]{0}', space=vmem, size = 0x4000, scoped, tag = 'input window, operand 1, single buffered']
    #allocation6 [shape = 's32[1]{0}', space=sflag, size = 0x4, scoped, tag = 'scoped memory for tpu_custom_call.1']
    #allocation7 [shape = 'u8[16384]{0}', space=vmem, size = 0x4000, scoped, tag = 'input window, operand 5, single buffered']
    #allocation8 [shape = 'u8[8192]{0}', space=vmem, size = 0x2000, scoped, tag = 'output window, operand 0, single buffered']
    %12 = vsyncpa [#allocation3], 0
    %13 = vsyncpa [#allocation6], 0
    %14 = vsyncpa [#allocation4], 0
    // Predicated region
    $region2: #{tpu_custom_call.1} parent=1 // pred_check
      _
    $region3: #{tpu_custom_call.1} parent=1 // pred_check_branch
      %16 = sbr.rel (0) target = $region5
    $region4: #{tpu_custom_call.1} parent=1 // pred_region
      %18 = vsyncadd [#allocation3], 0
      %s19 = sshll.u32 %s0, 4
      %s20 = int_to_ptr.hbm [resolvable:$true] %s19
      %s21 = sshll.u32 [#allocation2], 4
      %s22 = int_to_ptr.vmem [resolvable:$true] %s21
      %27 = dma.hbm_to_vmem [thread:$0]  %s20, 256, %s22, [#allocation3], 128, 128, 8
    $region5: #{tpu_custom_call.1} parent=1 // pred_fallthru
      _
    // Predicated region
    $region6: #{tpu_custom_call.1} parent=1 // pred_check
      _
    $region7: #{tpu_custom_call.1} parent=1 // pred_check_branch
      %29 = sbr.rel (0) target = $region9
    $region8: #{tpu_custom_call.1} parent=1 // pred_region
      %31 = vsyncadd [#allocation6], 0
      %s32 = sshll.u32 %s1, 4
      %s33 = int_to_ptr.hbm [resolvable:$true] %s32
      %s34 = sshll.u32 [#allocation5], 4
      %s35 = int_to_ptr.vmem [resolvable:$true] %s34
      %40 = dma.hbm_to_vmem [thread:$0]  %s33, 512, %s35, [#allocation6], 128, 128, 8
    $region9: #{tpu_custom_call.1} parent=1 // pred_fallthru
      _
    // Predicated region
    $region10: #{tpu_custom_call.1} parent=1 // pred_check
      _
    $region11: #{tpu_custom_call.1} parent=1 // pred_check_branch
      %42 = sbr.rel (0) target = $region13
    $region12: #{tpu_custom_call.1} parent=1 // pred_region
      _
    $region13: #{tpu_custom_call.1} parent=1 // pred_fallthru
      _
    // Predicated region
    $region14: #{tpu_custom_call.1} parent=1 // pred_check
      _
    $region15: #{tpu_custom_call.1} parent=1 // pred_check_branch
      %44 = sbr.rel (0) target = $region17
    $region16: #{tpu_custom_call.1} parent=1 // pred_region
      _
    $region17: #{tpu_custom_call.1} parent=1 // pred_fallthru
      _
    // Predicated region
    $region18: #{tpu_custom_call.1} parent=1 // pred_check
      _
    $region19: #{tpu_custom_call.1} parent=1 // pred_check_branch
      %46 = sbr.rel (0) target = $region21
    $region20: #{tpu_custom_call.1} parent=1 // pred_region
      _
    $region21: #{tpu_custom_call.1} parent=1 // pred_fallthru
      _
    // Predicated region
    $region22: #{tpu_custom_call.1} parent=1 // pred_check
      _
    $region23: #{tpu_custom_call.1} parent=1 // pred_check_branch
      %48 = sbr.rel (0) target = $region25
    $region24: #{tpu_custom_call.1} parent=1 // pred_region
      %50 = vsyncadd [#allocation6], 0
      %s51 = sshll.u32 %s5, 4
      %s52 = int_to_ptr.hbm [resolvable:$true] %s51
      %s53 = sshll.u32 [#allocation7], 4
      %s54 = int_to_ptr.vmem [resolvable:$true] %s53
      %59 = dma.hbm_to_vmem [thread:$0]  %s52, 512, %s54, [#allocation6], 128, 128, 8
    $region25: #{tpu_custom_call.1} parent=1 // pred_fallthru
      _
    // Predicated region
    $region26: #{tpu_custom_call.1} parent=1 // pred_check
      _
    $region27: #{tpu_custom_call.1} parent=1 // pred_check_branch
      %61 = sbr.rel (0) target = $region29
    $region28: #{tpu_custom_call.1} parent=1 // pred_region
      _
    $region29: #{tpu_custom_call.1} parent=1 // pred_fallthru
      _
    // Predicated region
    $region30: #{tpu_custom_call.1} parent=1 // pred_check
      _
    $region31: #{tpu_custom_call.1} parent=1 // pred_check_branch
      %63 = sbr.rel (0) target = $region33
    $region32: #{tpu_custom_call.1} parent=1 // pred_region
      %65 = dma.done [#allocation3], 256
    $region33: #{tpu_custom_call.1} parent=1 // pred_fallthru
      _
    // Predicated region
    $region34: #{tpu_custom_call.1} parent=1 // pred_check
      _
    $region35: #{tpu_custom_call.1} parent=1 // pred_check_branch
      %67 = sbr.rel (0) target = $region37
    $region36: #{tpu_custom_call.1} parent=1 // pred_region
      %69 = dma.done [#allocation6], 512
    $region37: #{tpu_custom_call.1} parent=1 // pred_fallthru
      _
    // Predicated region
    $region38: #{tpu_custom_call.1} parent=1 // pred_check
      _
    $region39: #{tpu_custom_call.1} parent=1 // pred_check_branch
      %71 = sbr.rel (0) target = $region41
    $region40: #{tpu_custom_call.1} parent=1 // pred_region
      %73 = dma.done [#allocation6], 512
    $region41: #{tpu_custom_call.1} parent=1 // pred_fallthru
      _
    %v74 = vld [vmem:[#allocation2] sm:$0xff]
    %v75 = vld [vmem:[#allocation2 + $0x8] sm:$0xff]
    %v76 = vld [vmem:[#allocation5] sm:$0xff]
    %v77 = vld [vmem:[#allocation5 + $0x8] sm:$0xff]
    %v78 = vld [vmem:[#allocation5 + $0x10] sm:$0xff]
    %v79 = vld [vmem:[#allocation5 + $0x18] sm:$0xff]
    %v80 = vld [vmem:[%s2] sm:$0x1]
    %v82 = vperm.slane %v80, 0
    %vm84 = vcmask 261120
    %v86 = vsel %vm84, %v74, 0
    %v89 = vsel %vm84, %v75, 0
    %91 = vmatpush.msra.mxu0 0.0
    %92 = vmatpush.msra.mxu0 0.0
    %93 = vmatpush.msra.mxu0 0.0
    %94 = vmatpush.msra.mxu0 0.0
    %95 = vmatpush.msra.mxu0 0.0
    %96 = vmatpush.msra.mxu0 0.0
    %97 = vmatpush.msra.mxu0 0.0
    %98 = vmatpush.msra.mxu0 0.0
    %99 = vmatpush.msra.mxu0 0.0
    %100 = vmatpush.msra.mxu0 0.0
    %101 = vmatpush.msra.mxu0 0.0
    %102 = vmatpush.msra.mxu0 0.0
    %103 = vmatpush.msra.mxu0 %v79
    %104 = vmatpush.msra.mxu0 %v78
    %105 = vmatpush.msra.mxu0 %v77
    %106 = vmatpush.msra.mxu0 %v76
    %107 = vmatmul.f32.gmra.mxu0 %v86
    %v108 = vpop.f32.mrf.mxu0
    %v109 = vadd.f32 %v82, %v108
    %110 = vmatmul.f32.gmra.mxu0 %v89
    %v111 = vpop.f32.mrf.mxu0
    %v112 = vadd.f32 %v82, %v111
    %113 = vdwg.mxu0
    %v114 = vmul.f32 %v109, %v109
    %v115 = vmul.f32 %v112, %v112
    %v116 = vmul.f32 %v109, %v114
    %v117 = vmul.f32 %v112, %v115
    %v118 = vmul.f32 %v116, 0.044715
    %v119 = vmul.f32 %v117, 0.044715
    %v120 = vadd.f32 %v109, %v118
    %v121 = vadd.f32 %v112, %v119
    %v122 = vmul.f32 %v120, 0.7978846
    %v123 = vmul.f32 %v121, 0.7978846
    %v124 = vtanh.pop %v122
    %v125 = vtanh.pop %v123
    %v126 = vadd.f32 %v124, 1.0
    %v127 = vadd.f32 %v125, 1.0
    %v128 = vmul.f32 %v126, 0.5
    %v129 = vmul.f32 %v127, 0.5
    %v130 = vmul.f32 %v109, %v128
    %v131 = vmul.f32 %v112, %v129
    %v132 = vsel %vm84, %v130, 0.0
    %133 = vadd.xlane.f32.xlu0 %v132
    %v134 = vpop.xlane.xlu0 %133
    %v135 = vsel %vm84, %v131, 0.0
    %136 = vadd.xlane.f32.xlu0 %v135
    %v137 = vpop.xlane.xlu0 %136
    %v138 = vmul.f32 %v134, 0.03125
    %v139 = vmul.f32 %v137, 0.03125
    %v140 = vsub.f32 %v130, %v138
    %v141 = vsub.f32 %v131, %v139
    %v142 = vmul.f32 %v140, %v140
    %v143 = vmul.f32 %v141, %v141
    %v144 = vsel %vm84, %v142, 0.0
    %145 = vadd.xlane.f32.xlu0 %v144
    %v146 = vpop.xlane.xlu0 %145
    %v147 = vsel %vm84, %v143, 0.0
    %148 = vadd.xlane.f32.xlu0 %v147
    %v149 = vpop.xlane.xlu0 %148
    %v150 = vmul.f32 %v146, 0.03125
    %v151 = vmul.f32 %v149, 0.03125
    %v152 = vadd.f32 %v150, 1e-12
    %v153 = vadd.f32 %v151, 1e-12
    %v154 = vrsqrt.pop %v152
    %v155 = vmul.f32 %v154, %v152
    %v156 = vmul.f32 %v155, %v154
    %v157 = vmul.f32 0.5, %v156
    %v158 = vsub.f32 1.5, %v157
    %v159 = vmul.f32 %v154, %v158
    %vm160 = vweird.f32 %v152
    %vm161 = vweird.f32 %v154
    %vm162 = vmor %vm160, %vm161
    %v163 = vsel %vm162, %v154, %v159
    %v164 = vrsqrt.pop %v153
    %v165 = vmul.f32 %v164, %v153
    %v166 = vmul.f32 %v165, %v164
    %v167 = vmul.f32 0.5, %v166
    %v168 = vsub.f32 1.5, %v167
    %v169 = vmul.f32 %v164, %v168
    %vm170 = vweird.f32 %v153
    %vm171 = vweird.f32 %v164
    %vm172 = vmor %vm170, %vm171
    %v173 = vsel %vm172, %v164, %v169
    %v174 = vmul.f32 %v140, %v163
    %v175 = vmul.f32 %v141, %v173
    %v176 = vld [vmem:[%s3] sm:$0x1]
    %v178 = vperm.slane %v176, 0
    %v180 = vmul.f32 %v174, %v178
    %v181 = vmul.f32 %v175, %v178
    %v182 = vld [vmem:[%s4] sm:$0x1]
    %v184 = vperm.slane %v182, 0
    %v186 = vadd.f32 %v180, %v184
    %v187 = vadd.f32 %v181, %v184
    %v188 = vld [vmem:[#allocation7] sm:$0xff]
    %v189 = vld [vmem:[#allocation7 + $0x8] sm:$0xff]
    %v190 = vld [vmem:[#allocation7 + $0x10] sm:$0xff]
    %v191 = vld [vmem:[#allocation7 + $0x18] sm:$0xff]
    %v192 = vld [vmem:[%s6] sm:$0x1]
    %v194 = vperm.slane %v192, 0
    %v197 = vsel %vm84, %v186, 0
    %v200 = vsel %vm84, %v187, 0
    %202 = vmatpush.msra.mxu0 0.0
    %203 = vmatpush.msra.mxu0 0.0
    %204 = vmatpush.msra.mxu0 0.0
    %205 = vmatpush.msra.mxu0 0.0
    %206 = vmatpush.msra.mxu0 0.0
    %207 = vmatpush.msra.mxu0 0.0
    %208 = vmatpush.msra.mxu0 0.0
    %209 = vmatpush.msra.mxu0 0.0
    %210 = vmatpush.msra.mxu0 0.0
    %211 = vmatpush.msra.mxu0 0.0
    %212 = vmatpush.msra.mxu0 0.0
    %213 = vmatpush.msra.mxu0 0.0
    %214 = vmatpush.msra.mxu0 %v191
    %215 = vmatpush.msra.mxu0 %v190
    %216 = vmatpush.msra.mxu0 %v189
    %217 = vmatpush.msra.mxu0 %v188
    %218 = vmatmul.f32.gmra.mxu0 %v197
    %v219 = vpop.f32.mrf.mxu0
    %v220 = vadd.f32 %v194, %v219
    %221 = vmatmul.f32.gmra.mxu0 %v200
    %v222 = vpop.f32.mrf.mxu0
    %v223 = vadd.f32 %v194, %v222
    %224 = vdwg.mxu0
    %225 = vst [vmem:[#allocation8] sm:$0xff] %v220
    %226 = vst [vmem:[#allocation8 + $0x8] sm:$0xff] %v223
    // Predicated region
    $region42: #{tpu_custom_call.1} parent=1 // pred_check
      _
    $region43: #{tpu_custom_call.1} parent=1 // pred_check_branch
      %228 = sbr.rel (0) target = $region45
    $region44: #{tpu_custom_call.1} parent=1 // pred_region
      %230 = vsyncadd [#allocation4], 0
      %s231 = sshll.u32 [#allocation8], 4
      %s232 = int_to_ptr.vmem [resolvable:$true] %s231
      %s233 = sshll.u32 %s7, 4
      %s234 = int_to_ptr.hbm [resolvable:$true] %s233
      %239 = dma.vmem_to_hbm [thread:$0]  %s232, 256, %s234, [#allocation4], 128, 128, 8
    $region45: #{tpu_custom_call.1} parent=1 // pred_fallthru
      _
    // Predicated region
    $region46: #{tpu_custom_call.1} parent=1 // pred_check
      _
    $region47: #{tpu_custom_call.1} parent=1 // pred_check_branch
      %241 = sbr.rel (0) target = $region49
    $region48: #{tpu_custom_call.1} parent=1 // pred_region
      %243 = dma.done [#allocation4], 256
    $region49: #{tpu_custom_call.1} parent=1 // pred_fallthru
      _
    %244 = vsyncpa [#allocation3], 1
    %245 = vsyncpa [#allocation6], 1
    %246 = vsyncpa [#allocation4], 1

</llo_original>
